<compile_context>
chip_gen: v7x
topology: tpu7x:2x2x1
jax: 0.10.0
libtpu: 0.0.40
codegen_flags: <defaults>
</compile_context>

<pallas_src>
import functools

import jax
import jax.numpy as jnp
from jax.experimental import pallas as pl
from jax.experimental.pallas import tpu as pltpu


def _round_up(x, m):
    return ((x + m - 1) // m) * m


def _sublane(dtype):
    # Rows packed per sublane tile: f32 -> 8, bf16 -> 16, int8/fp8 -> 32.
    return {4: 8, 2: 16, 1: 32}.get(jnp.dtype(dtype).itemsize, 8)


@functools.lru_cache(maxsize=None)
def _vmem_capacity_bytes():
    """Physical VMEM per TensorCore; conservative fallback if the query fails."""
    try:
        return int(pltpu.get_tpu_info().vmem_capacity_bytes)
    except Exception:
        return 64 * 2**20  # v7x per-TC minimum across current generations


_INTERNAL_SCRATCH = 2 * 2**20  # allowance for Mosaic-internal scratch


def _footprint_bytes(tile_m, tile_f, n_embed, x_isz, w_isz, w_buffers):
    """Estimated VMEM footprint of one grid step (buffered blocks + scratch)."""
    x_out = 2 * 2 * tile_m * n_embed * x_isz                        # x + out, double-buffered
    weights = w_buffers * (2 * n_embed * tile_f + tile_f) * w_isz   # W1 + W2 + b1 chunks
    b2 = 2 * n_embed * w_isz
    acc = tile_m * n_embed * 4                                      # f32 accumulator
    h = tile_m * tile_f * (4 + w_isz)                               # f32 h + cast for 2nd matmul
    return x_out + weights + b2 + acc + h + _INTERNAL_SCRATCH


def _select_tiles(M, n_embed, Fp, x_isz, w_isz, sublane, vmem_cap,
                  tile_m=None, tile_f=None, weight_buffers=None):
    """Pick (tile_m, tile_f, weight_buffers, vmem_limit) from the chip's VMEM."""
    budget = (vmem_cap * 4) // 5  # ~20% headroom
    M_rows = _round_up(M, sublane)

    def clamp_m(tm):
        return max(sublane, min(_round_up(tm, sublane), M_rows))

    def cdiv(a, b):
        return -(-a // b)

    # ~1024 rows keeps the per-M-tile weight stream above the MXU roofline on
    # v6e/v7x whenever the ffn axis must be chunked (weights re-read per M tile).
    tm = clamp_m(tile_m if tile_m is not None else 1024)

    # ffn-tile candidates: full residency first (weights DMA'd once for the
    # whole grid), then shrink tile_f before tile_m (the roofline is set by
    # tile_m, not tile_f). Candidates must divide the padded ffn dim.
    if tile_f is not None:
        t = min(_round_up(tile_f, 128), Fp)
        while Fp % t:
            t -= 128
        tf_candidates = [t]
    else:
        tf_candidates = [Fp] + [t for t in (512, 256, 128) if t < Fp and Fp % t == 0]

    def fits(tm_, tf_, nbuf):
        return _footprint_bytes(tm_, tf_, n_embed, x_isz, w_isz, nbuf) <= budget

    tf = None
    for cand in tf_candidates:
        if fits(tm, cand, 2):
            tf = cand
            break
    if tf is None:
        # Last resort: shrink the M tile as well (prefer ~768 before halving).
        tf = tf_candidates[-1]
        while tm > sublane and not fits(tm, tf, 2):
            step = 256 if tm > 256 else max(tm // 2, 1)
            tm = clamp_m(tm - step)

    num_f = Fp // tf

    # Deeper weight buffering when the ffn axis is chunked hides the weight DMA
    # at each M-tile transition (cheap on 128 MiB parts, skipped if tight).
    if weight_buffers is None:
        nbuf = 3 if (num_f > 1 and fits(tm, tf, 3)) else 2
    else:
        nbuf = int(weight_buffers)

    # Megacore: when weights are resident (single f step), splitting the M axis
    # into >=2 parallel blocks is free and lets v7x's 2 TensorCores share the
    # work. (With a chunked ffn axis we keep one big M tile: splitting would
    # double the weight re-stream on single-TC chips.)
    if tile_m is None and num_f == 1 and M_rows > sublane:
        if cdiv(M_rows, tm) < 2:
            tm = clamp_m(cdiv(M_rows, 2))

    est = _footprint_bytes(tm, tf, n_embed, x_isz, w_isz, nbuf)
    vmem_limit = int(min(vmem_cap, max(est * 5 // 4, 32 * 2**20)))
    return tm, tf, nbuf, vmem_limit


def ffn_kernel(x_ref, w1_ref, b1_ref, w2_ref, b2_ref, o_ref, acc_ref):
    """One (tile_m, tile_f) step of x @ W1 + b1 -> ReLU -> @ W2 (+ b2 at end)."""
    f = pl.program_id(1)

    @pl.when(f == 0)
    def _():
        acc_ref[...] = jnp.zeros_like(acc_ref)

    # First matmul on this ffn chunk; bias + ReLU are elementwise over the ffn
    # axis, so applying them per-chunk before the partial second matmul is exact.
    h = jnp.dot(x_ref[...], w1_ref[...], preferred_element_type=jnp.float32)
    h = jnp.maximum(h + b1_ref[...].astype(jnp.float32), 0.0)

    # Partial second matmul, accumulated in f32 VMEM scratch.
    # NOTE: for bf16 weights, h is rounded to bf16 for the MXU (standard bf16
    # matmul numerics); the accumulation itself stays in f32.
    acc_ref[...] += jnp.dot(
        h.astype(w2_ref.dtype), w2_ref[...], preferred_element_type=jnp.float32
    )

    @pl.when(f == pl.num_programs(1) - 1)
    def _():
        out = acc_ref[...] + b2_ref[...].astype(jnp.float32)
        # TODO(synk): nn.Dropout is identity in eval mode; training-mode dropout
        # would use pltpu.prng_seed / pltpu.prng_random_bits for a keep-mask.
        o_ref[...] = out.astype(o_ref.dtype)


@functools.partial(jax.jit, static_argnames=("tile_m", "tile_f", "weight_buffers"))
def feed_forward(x, w1, b1, w2, b2, *, tile_m=None, tile_f=None, weight_buffers=None):
    """x: (B, T, n_embed) -> (B, T, n_embed). Weights from prepare_params()."""
    B, T, n_embed = x.shape
    Fp = w1.shape[1]
    assert Fp % 128 == 0, "pad ffn_dim to a multiple of 128 via prepare_params()"
    # NOTE: typical model dims have n_embed % 128 == 0, which keeps output
    # stores lane-dense (unmasked vst); smaller dims still compile because the
    # block spans the full feature extent.

    M = B * T
    x2d = x.reshape(M, n_embed)

    x_isz = jnp.dtype(x.dtype).itemsize
    w_isz = jnp.dtype(w1.dtype).itemsize
    sublane = _sublane(x.dtype)

    tm, tf, nbuf, vmem_limit = _select_tiles(
        M, n_embed, Fp, x_isz, w_isz, sublane, _vmem_capacity_bytes(),
        tile_m=tile_m, tile_f=tile_f, weight_buffers=weight_buffers)

    Mp = _round_up(M, tm)
    if Mp != M:
        x2d = jnp.pad(x2d, ((0, Mp - M), (0, 0)))  # zero rows -> sliced off below

    grid = (Mp // tm, Fp // tf)
    w_pipe = {"pipeline_mode": pl.Buffered(nbuf)} if nbuf != 2 else {}

    out2d = pl.pallas_call(
        ffn_kernel,
        out_shape=jax.ShapeDtypeStruct((Mp, n_embed), x.dtype),
        grid_spec=pltpu.PrefetchScalarGridSpec(
            num_scalar_prefetch=0,
            grid=grid,
            in_specs=[
                pl.BlockSpec((tm, n_embed), lambda i, f: (i, 0)),            # x rows
                pl.BlockSpec((n_embed, tf), lambda i, f: (0, f), **w_pipe),  # W1 chunk
                pl.BlockSpec((1, tf), lambda i, f: (0, f)),                  # b1 chunk
                pl.BlockSpec((tf, n_embed), lambda i, f: (f, 0), **w_pipe),  # W2 chunk
                pl.BlockSpec((1, n_embed), lambda i, f: (0, 0)),             # b2
            ],
            out_specs=pl.BlockSpec((tm, n_embed), lambda i, f: (i, 0)),
            scratch_shapes=[pltpu.VMEM((tm, n_embed), jnp.float32)],
        ),
        compiler_params=pltpu.CompilerParams(
            dimension_semantics=("parallel", "arbitrary"),
            vmem_limit_bytes=vmem_limit,
        ),
    )(x2d, w1, b1, w2, b2)

    return out2d[:M].reshape(B, T, n_embed)


def init_params(key, n_embed, ffn_dim, dtype=jnp.float32):
    """Mirrors nn.Linear's uniform(-1/sqrt(fan_in), +1/sqrt(fan_in)) init, in
    PyTorch layout: weight (out, in), bias (out,)."""
    k1, k2, k3, k4 = jax.random.split(key, 4)
    bound1 = 1.0 / (n_embed ** 0.5)
    bound2 = 1.0 / (ffn_dim ** 0.5)
    w1 = jax.random.uniform(k1, (ffn_dim, n_embed), jnp.float32, -bound1, bound1)
    b1 = jax.random.uniform(k2, (ffn_dim,), jnp.float32, -bound1, bound1)
    w2 = jax.random.uniform(k3, (n_embed, ffn_dim), jnp.float32, -bound2, bound2)
    b2 = jax.random.uniform(k4, (n_embed,), jnp.float32, -bound2, bound2)
    return tuple(p.astype(dtype) for p in (w1, b1, w2, b2))


def prepare_params(w1, b1, w2, b2):
    """One-time parameter prep, hoisted out of the per-call jitted path.

    Takes PyTorch-layout Linear params (weight (out, in), bias (out,)) and
    returns kernel-layout params: weights (in, out), biases (1, out), with the
    ffn dimension zero-padded to a multiple of 128. Zero-padded ffn columns
    contribute ReLU(0 + 0) @ 0 == 0 exactly.
    """
    w1 = jnp.asarray(w1).T            # (n_embed, ffn_dim)
    w2 = jnp.asarray(w2).T            # (ffn_dim, n_embed)
    b1 = jnp.asarray(b1).reshape(1, -1)
    b2 = jnp.asarray(b2).reshape(1, -1)
    ffn_dim = w1.shape[1]
    Fp = _round_up(ffn_dim, 128)
    if Fp != ffn_dim:
        w1 = jnp.pad(w1, ((0, 0), (0, Fp - ffn_dim)))
        b1 = jnp.pad(b1, ((0, 0), (0, Fp - ffn_dim)))
        w2 = jnp.pad(w2, ((0, Fp - ffn_dim), (0, 0)))
    return w1, b1, w2, b2


def _reference(x, w1, b1, w2, b2):
    """Pure-JAX f32 reference on PyTorch-layout params."""
    xf = x.astype(jnp.float32)
    h = jnp.maximum(xf @ w1.T.astype(jnp.float32) + b1.astype(jnp.float32), 0.0)
    return h @ w2.T.astype(jnp.float32) + b2.astype(jnp.float32)


if __name__ == "__main__":
    key = jax.random.PRNGKey(0)

    def run_case(idx, B, T, n_embed, ffn_dim, dtype, atol, **tile_kwargs):
        kx, kp = jax.random.split(jax.random.fold_in(key, idx))
        x = jax.random.normal(kx, (B, T, n_embed), dtype=jnp.float32)
        params_pt = init_params(kp, n_embed, ffn_dim, dtype=jnp.float32)
        ref = _reference(x, *params_pt)

        x_d = x.astype(dtype)
        params_d = tuple(p.astype(dtype) for p in params_pt)
        kparams = prepare_params(*params_d)          # one-time weight prep/pad
        out = jax.block_until_ready(feed_forward(x_d, *kparams, **tile_kwargs))
        assert out.shape == (B, T, n_embed)
        err = float(jnp.max(jnp.abs(out.astype(jnp.float32) - ref)))
        assert err <= atol, (idx, err)

    # 1) f32, shapes consistent with the module (batch=2, seq=8, n_embed=32).
    run_case(0, 2, 8, 32, 128, jnp.float32, 1e-4)
    # 2) bf16 (preferred MXU path on v6e/v7x); bf16 h-cast -> looser tolerance.
    run_case(1, 2, 8, 32, 128, jnp.bfloat16, 5e-2)
    # 3) chunked ffn axis: multiple M tiles, f32 accumulation across f steps,
    #    and 3-deep weight-chunk buffering (pl.Buffered).
    run_case(2, 4, 64, 128, 512, jnp.bfloat16, 5e-2, tile_m=128, tile_f=128)
    # 4) non-multiple-of-128 ffn_dim exercises the one-time padding path.
    run_case(3, 2, 8, 32, 96, jnp.float32, 1e-4)

    print("KERNEL_OK")
</pallas_src>

<mosaic_0001>
module attributes {stable_mosaic.version = 11 : i64} {
  func.func @ffn_kernel(%arg0: i32, %arg1: i32, %arg2: memref<8x32xf32, #tpu.memory_space<vmem>>, %arg3: memref<32x128xf32, #tpu.memory_space<vmem>>, %arg4: memref<1x128xf32, #tpu.memory_space<vmem>>, %arg5: memref<128x32xf32, #tpu.memory_space<vmem>>, %arg6: memref<1x32xf32, #tpu.memory_space<vmem>>, %arg7: memref<8x32xf32, #tpu.memory_space<vmem>>, %arg8: memref<8x32xf32, #tpu.memory_space<vmem>>) attributes {dimension_semantics = [#tpu.dimension_semantics<parallel>, #tpu.dimension_semantics<arbitrary>], iteration_bounds = array<i64: 2, 1>, scalar_prefetch = 0 : i64, scratch_operands = 1 : i64, tpu.core_type = #tpu.core_type<tc>, window_params = [{transform_indices = @transform_0, window_bounds = array<i64: 8, 32>}, {transform_indices = @transform_1, window_bounds = array<i64: 32, 128>}, {transform_indices = @transform_2, window_bounds = array<i64: 1, 128>}, {transform_indices = @transform_3, window_bounds = array<i64: 128, 32>}, {pipeline_mode = #tpu.pipeline_mode<synchronous>, transform_indices = @transform_4, window_bounds = array<i64: 1, 32>}, {transform_indices = @transform_5, window_bounds = array<i64: 8, 32>}]} {
    %c0_i32 = arith.constant 0 : i32
    %0 = arith.cmpi eq, %arg1, %c0_i32 : i32
    %1 = arith.extui %0 : i1 to i32
    %c0_i32_0 = arith.constant 0 : i32
    %2 = arith.cmpi ne, %1, %c0_i32_0 : i32
    scf.if %2 {
      %cst_16 = arith.constant 0.000000e+00 : f32
      %19 = vector.broadcast %cst_16 : f32 to vector<8x32xf32>
      %c0_17 = arith.constant 0 : index
      %c0_18 = arith.constant 0 : index
      %20 = vector.load %arg8[%c0_17, %c0_18] : memref<8x32xf32, #tpu.memory_space<vmem>>, vector<8x32xf32>
      tpu.vector_store %arg8[%c0_17, %c0_18], %19 {strides = array<i32>} : memref<8x32xf32, #tpu.memory_space<vmem>>, vector<8x32xf32>,
    } else {
    }
    %c0 = arith.constant 0 : index
    %c0_1 = arith.constant 0 : index
    %3 = vector.load %arg2[%c0, %c0_1] : memref<8x32xf32, #tpu.memory_space<vmem>>, vector<8x32xf32>
    %c0_2 = arith.constant 0 : index
    %c0_3 = arith.constant 0 : index
    %4 = vector.load %arg3[%c0_2, %c0_3] : memref<32x128xf32, #tpu.memory_space<vmem>>, vector<32x128xf32>
    %cst = arith.constant dense<0.000000e+00> : vector<8x128xf32>
    %5 = tpu.matmul %3, %4, %cst {dimension_numbers = #tpu.dot_dimension_numbers<[1], [0], [0], [1], [0, 0, 1, 1], [], []>} : vector<8x32xf32>, vector<32x128xf32>, vector<8x128xf32> -> vector<8x128xf32>
    %c0_4 = arith.constant 0 : index
    %c0_5 = arith.constant 0 : index
    %6 = vector.load %arg4[%c0_4, %c0_5] : memref<1x128xf32, #tpu.memory_space<vmem>>, vector<1x128xf32>
    %7 = vector.broadcast %6 : vector<1x128xf32> to vector<8x128xf32>
    %8 = arith.addf %5, %7 : vector<8x128xf32>
    %cst_6 = arith.constant 0.000000e+00 : f32
    %9 = vector.broadcast %cst_6 : f32 to vector<8x128xf32>
    %10 = arith.maximumf %8, %9 : vector<8x128xf32>
    %c0_7 = arith.constant 0 : index
    %c0_8 = arith.constant 0 : index
    %11 = vector.load %arg8[%c0_7, %c0_8] : memref<8x32xf32, #tpu.memory_space<vmem>>, vector<8x32xf32>
    %c0_9 = arith.constant 0 : index
    %c0_10 = arith.constant 0 : index
    %12 = vector.load %arg5[%c0_9, %c0_10] : memref<128x32xf32, #tpu.memory_space<vmem>>, vector<128x32xf32>
    %cst_11 = arith.constant dense<0.000000e+00> : vector<8x32xf32>
    %13 = tpu.matmul %10, %12, %cst_11 {dimension_numbers = #tpu.dot_dimension_numbers<[1], [0], [0], [1], [0, 0, 1, 1], [], []>} : vector<8x128xf32>, vector<128x32xf32>, vector<8x32xf32> -> vector<8x32xf32>
    %14 = arith.addf %11, %13 : vector<8x32xf32>
    %c0_12 = arith.constant 0 : index
    %c0_13 = arith.constant 0 : index
    %15 = vector.load %arg8[%c0_12, %c0_13] : memref<8x32xf32, #tpu.memory_space<vmem>>, vector<8x32xf32>
    tpu.vector_store %arg8[%c0_12, %c0_13], %14 {strides = array<i32>} : memref<8x32xf32, #tpu.memory_space<vmem>>, vector<8x32xf32>,
    %c0_i32_14 = arith.constant 0 : i32
    %16 = arith.cmpi eq, %arg1, %c0_i32_14 : i32
    %17 = arith.extui %16 : i1 to i32
    %c0_i32_15 = arith.constant 0 : i32
    %18 = arith.cmpi ne, %17, %c0_i32_15 : i32
    scf.if %18 {
      %c0_16 = arith.constant 0 : index
      %c0_17 = arith.constant 0 : index
      %19 = vector.load %arg8[%c0_16, %c0_17] : memref<8x32xf32, #tpu.memory_space<vmem>>, vector<8x32xf32>
      %c0_18 = arith.constant 0 : index
      %c0_19 = arith.constant 0 : index
      %20 = vector.load %arg6[%c0_18, %c0_19] : memref<1x32xf32, #tpu.memory_space<vmem>>, vector<1x32xf32>
      %21 = vector.broadcast %20 : vector<1x32xf32> to vector<8x32xf32>
      %22 = arith.addf %19, %21 : vector<8x32xf32>
      %c0_20 = arith.constant 0 : index
      %c0_21 = arith.constant 0 : index
      %23 = vector.load %arg7[%c0_20, %c0_21] : memref<8x32xf32, #tpu.memory_space<vmem>>, vector<8x32xf32>
      tpu.vector_store %arg7[%c0_20, %c0_21], %22 {strides = array<i32>} : memref<8x32xf32, #tpu.memory_space<vmem>>, vector<8x32xf32>,
    } else {
    }
    return
  }
  func.func @transform_0(%arg0: i32, %arg1: i32) -> (i32, i32) {
    %c0_i32 = arith.constant 0 : i32
    %c0_i32_0 = arith.constant 0 : i32
    return %arg0, %c0_i32 : i32, i32
  }
  func.func @transform_1(%arg0: i32, %arg1: i32) -> (i32, i32) {
    %c0_i32 = arith.constant 0 : i32
    %c0_i32_0 = arith.constant 0 : i32
    return %c0_i32, %arg1 : i32, i32
  }
  func.func @transform_2(%arg0: i32, %arg1: i32) -> (i32, i32) {
    %c0_i32 = arith.constant 0 : i32
    %c0_i32_0 = arith.constant 0 : i32
    return %c0_i32, %arg1 : i32, i32
  }
  func.func @transform_3(%arg0: i32, %arg1: i32) -> (i32, i32) {
    %c0_i32 = arith.constant 0 : i32
    %c0_i32_0 = arith.constant 0 : i32
    return %arg1, %c0_i32 : i32, i32
  }
  func.func @transform_4(%arg0: i32, %arg1: i32) -> (i32, i32) {
    %c0_i32 = arith.constant 0 : i32
    %c0_i32_0 = arith.constant 0 : i32
    %c0_i32_1 = arith.constant 0 : i32
    return %c0_i32, %c0_i32_0 : i32, i32
  }
  func.func @transform_5(%arg0: i32, %arg1: i32) -> (i32, i32) {
    %c0_i32 = arith.constant 0 : i32
    %c0_i32_0 = arith.constant 0 : i32
    return %arg0, %c0_i32 : i32, i32
  }
}

</mosaic_0001>

<llo_original>
// kernel: feed_forward.1
$region0: #{feed_forward.1}
  #allocation0 [shape = 'u32[]', space=smem, size = 0x4, offset = 0x4, fixed_abs, tag = 'smem constant byte address 0x4 - core index']
  #allocation1 [shape = 'u32[144,128]{1,0:T(1,128)}', space=vmem, size = 0x12000, scoped, tag = 'internal scratch']
  #allocation2 [shape = 'f32[8,32]{1,0:T(8,128)}', space=vmem, size = 0x1000, scoped, tag = 'scratch operand']
  %s0 = inlined_call_operand.vmem [shape: f32[16,32], index: 0, kind: input, shape index: {}]
  %s1 = inlined_call_operand.vmem [shape: f32[32,128], index: 1, kind: input, shape index: {}]
  %s2 = inlined_call_operand.vmem [shape: f32[1,128], index: 2, kind: input, shape index: {}]
  %s3 = inlined_call_operand.vmem [shape: f32[128,32], index: 3, kind: input, shape index: {}]
  %s4 = inlined_call_operand.vmem [shape: f32[1,32], index: 4, kind: input, shape index: {}]
  %s5 = inlined_call_operand.hbm [shape: f32[16,32], index: 5, kind: output, shape index: {}]
  %s6 = sld [smem:[#allocation0]]
  $region61: #{feed_forward.1} parent=0
    _
  %s8 = ssub.s32 1, %s6
  %s9 = scalar_select 0, %s8, %s6
  $region1: #{feed_forward.1} parent=0
    #allocation3 [shape = 'u8[8192]{0}', space=vmem, size = 0x2000, scoped, tag = 'output window, operand 0']
    #allocation4 [shape = 's32[2]{0}', space=sflag, size = 0x8, scoped, tag = 'scoped memory for feed_forward.1']
    %10 = vsyncpa [#allocation4], 0
    %s11 = scalar_lea.sflag [#allocation4], 1
    %12 = vsyncpa %s11, 0
    loop: start=0, step=1, limit=4
    $region2: #{feed_forward.1} parent=1 // loop_pre_header
      _
    $region3: #{feed_forward.1} parent=1 // loop_header
      %s14 = sphi 0, %s18
      %p15 = scmp.ge.s32.totalorder %s14, 4
      %s21 = sphi 0, %s33
      %s22 = sphi 0, %s29
      %s23 = sphi 0, %s21
      %s24 = sphi 0, %s22
      %s25 = sphi 0, %s23
      %s26 = sphi 0, %s24
      %s36 = sphi 0, %s38
      %s39 = sphi 0, %s36
      %s40 = sphi 0, %s39
      %s56 = sphi 0, %s40
      %s62 = sphi 0, %s64
      %s65 = sphi 0, %s62
      %s66 = sphi 0, %s65
      %s82 = sphi 0, %s66
      %s88 = sphi 0, %s90
      %s91 = sphi 0, %s88
      %s92 = sphi 0, %s91
      %s108 = sphi 0, %s92
      %s114 = sphi 0, %s116
      %s117 = sphi 0, %s114
      %s118 = sphi 0, %s117
      %s134 = sphi 0, %s118
      %s138 = sphi 0, %s138
      %s140 = sphi 0, %s138
      %s141 = sphi 0, %s140
      %s155 = sphi 0, %s141
      %s161 = sphi 0, %s163
      %s164 = sphi 0, %s161
      %s165 = sphi 0, %s164
      %s181 = sphi 0, %s165
    $region4: #{feed_forward.1} parent=1 // loop_header_branch
      %17 = sbr.rel (%p15) target = $region8
    $region5: #{feed_forward.1} parent=1 // loop_body
      %s19 = ssub.s32 %s14, 1
      %s20 = ssub.s32 %s14, 2
      %s27 = sadd.s32 1, %s22
      %p28 = scmp.ge.s32.totalorder %s27, 1
      %s29 = scalar_select %p28, 0, %s27
      %s30 = sadd.s32 1, %s21
      %s31 = scalar_select %p28, %s30, %s21
      %p32 = scmp.ge.s32.totalorder %s31, 2
      %s33 = scalar_select %p32, 0, %s31
      %s34 = ssub.s32 %s21, %s33
      %p35 = scmp.eq.s32.totalorder %s34, 0
      %s37 = sadd.s32 %s36, 1
      %s38 = scalar_select %p35, %s36, %s37
      %p41 = pneg %p35
      %p42 = scmp.eq.s32.totalorder %s14, 1
      %p43 = por %p41, %p42
      %p44 = scmp.ne.s32.totalorder %s36, %s39
      %p45 = scmp.eq.s32.totalorder %s14, 0
      %p46 = por %p44, %p45
      %p47 = scmp.ne.s32.totalorder %s36, %s39
      %p48 = scmp.eq.s32.totalorder %s19, 1
      %p49 = por %p47, %p48
      %p50 = scmp.ne.s32.totalorder %s39, %s40
      %p51 = scmp.eq.s32.totalorder %s19, 0
      %p52 = por %p50, %p51
      %p53 = scmp.ne.s32.totalorder %s39, %s40
      %p54 = scmp.eq.s32.totalorder %s20, 1
      %p55 = por %p53, %p54
      %p57 = scmp.ne.s32.totalorder %s40, %s56
      %p58 = scmp.eq.s32.totalorder %s20, 0
      %p59 = por %p57, %p58
      %s60 = ssub.s32 %s22, %s29
      %p61 = scmp.eq.s32.totalorder %s60, 0
      %s63 = sadd.s32 %s62, 1
      %s64 = scalar_select %p61, %s62, %s63
      %p67 = pneg %p61
      %p68 = scmp.eq.s32.totalorder %s14, 1
      %p69 = por %p67, %p68
      %p70 = scmp.ne.s32.totalorder %s62, %s65
      %p71 = scmp.eq.s32.totalorder %s14, 0
      %p72 = por %p70, %p71
      %p73 = scmp.ne.s32.totalorder %s62, %s65
      %p74 = scmp.eq.s32.totalorder %s19, 1
      %p75 = por %p73, %p74
      %p76 = scmp.ne.s32.totalorder %s65, %s66
      %p77 = scmp.eq.s32.totalorder %s19, 0
      %p78 = por %p76, %p77
      %p79 = scmp.ne.s32.totalorder %s65, %s66
      %p80 = scmp.eq.s32.totalorder %s20, 1
      %p81 = por %p79, %p80
      %p83 = scmp.ne.s32.totalorder %s66, %s82
      %p84 = scmp.eq.s32.totalorder %s20, 0
      %p85 = por %p83, %p84
      %s86 = ssub.s32 %s22, %s29
      %p87 = scmp.eq.s32.totalorder %s86, 0
      %s89 = sadd.s32 %s88, 1
      %s90 = scalar_select %p87, %s88, %s89
      %p93 = pneg %p87
      %p94 = scmp.eq.s32.totalorder %s14, 1
      %p95 = por %p93, %p94
      %p96 = scmp.ne.s32.totalorder %s88, %s91
      %p97 = scmp.eq.s32.totalorder %s14, 0
      %p98 = por %p96, %p97
      %p99 = scmp.ne.s32.totalorder %s88, %s91
      %p100 = scmp.eq.s32.totalorder %s19, 1
      %p101 = por %p99, %p100
      %p102 = scmp.ne.s32.totalorder %s91, %s92
      %p103 = scmp.eq.s32.totalorder %s19, 0
      %p104 = por %p102, %p103
      %p105 = scmp.ne.s32.totalorder %s91, %s92
      %p106 = scmp.eq.s32.totalorder %s20, 1
      %p107 = por %p105, %p106
      %p109 = scmp.ne.s32.totalorder %s92, %s108
      %p110 = scmp.eq.s32.totalorder %s20, 0
      %p111 = por %p109, %p110
      %s112 = ssub.s32 %s22, %s29
      %p113 = scmp.eq.s32.totalorder %s112, 0
      %s115 = sadd.s32 %s114, 1
      %s116 = scalar_select %p113, %s114, %s115
      %p119 = pneg %p113
      %p120 = scmp.eq.s32.totalorder %s14, 1
      %p121 = por %p119, %p120
      %p122 = scmp.ne.s32.totalorder %s114, %s117
      %p123 = scmp.eq.s32.totalorder %s14, 0
      %p124 = por %p122, %p123
      %p125 = scmp.ne.s32.totalorder %s114, %s117
      %p126 = scmp.eq.s32.totalorder %s19, 1
      %p127 = por %p125, %p126
      %p128 = scmp.ne.s32.totalorder %s117, %s118
      %p129 = scmp.eq.s32.totalorder %s19, 0
      %p130 = por %p128, %p129
      %p131 = scmp.ne.s32.totalorder %s117, %s118
      %p132 = scmp.eq.s32.totalorder %s20, 1
      %p133 = por %p131, %p132
      %p135 = scmp.ne.s32.totalorder %s118, %s134
      %p136 = scmp.eq.s32.totalorder %s20, 0
      %p137 = por %p135, %p136
      %s139 = sadd.s32 %s138, 1
      %p142 = scmp.eq.s32.totalorder %s14, 1
      %p143 = scmp.ne.s32.totalorder %s138, %s140
      %p144 = scmp.eq.s32.totalorder %s14, 0
      %p145 = por %p143, %p144
      %p146 = scmp.ne.s32.totalorder %s138, %s140
      %p147 = scmp.eq.s32.totalorder %s19, 1
      %p148 = por %p146, %p147
      %p149 = scmp.ne.s32.totalorder %s140, %s141
      %p150 = scmp.eq.s32.totalorder %s19, 0
      %p151 = por %p149, %p150
      %p152 = scmp.ne.s32.totalorder %s140, %s141
      %p153 = scmp.eq.s32.totalorder %s20, 1
      %p154 = por %p152, %p153
      %p156 = scmp.ne.s32.totalorder %s141, %s155
      %p157 = scmp.eq.s32.totalorder %s20, 0
      %p158 = por %p156, %p157
      %s159 = ssub.s32 %s21, %s33
      %p160 = scmp.eq.s32.totalorder %s159, 0
      %s162 = sadd.s32 %s161, 1
      %s163 = scalar_select %p160, %s161, %s162
      %p166 = pneg %p160
      %p167 = scmp.eq.s32.totalorder %s14, 1
      %p168 = por %p166, %p167
      %p169 = scmp.ne.s32.totalorder %s161, %s164
      %p170 = scmp.eq.s32.totalorder %s14, 0
      %p171 = por %p169, %p170
      %p172 = scmp.ne.s32.totalorder %s161, %s164
      %p173 = scmp.eq.s32.totalorder %s19, 1
      %p174 = por %p172, %p173
      %p175 = scmp.ne.s32.totalorder %s164, %s165
      %p176 = scmp.eq.s32.totalorder %s19, 0
      %p177 = por %p175, %p176
      %p178 = scmp.ne.s32.totalorder %s164, %s165
      %p179 = scmp.eq.s32.totalorder %s20, 1
      %p180 = por %p178, %p179
      %p182 = scmp.ne.s32.totalorder %s165, %s181
      %p183 = scmp.eq.s32.totalorder %s20, 0
      %p184 = por %p182, %p183
      %p185 = scmp.le.s32.totalorder 1, %s14
      %p186 = scmp.lt.s32.totalorder %s14, 3
      %p187 = pnand %p185, %p186
      %p188 = pneg %p187
      // Predicated region
      $region9: #{feed_forward.1} parent=5 // pred_check
        _
      $region10: #{feed_forward.1} parent=5 // pred_check_branch
        %190 = sbr.rel (%p187) target = $region12
      $region11: #{feed_forward.1} parent=5 // pred_region
        %s191 = ssub.s32 %s14, 1
        // Predicated region
        $region13: #{feed_forward.1} parent=11 // pred_check
          %p192 = pneg %p78
        $region14: #{feed_forward.1} parent=11 // pred_check_branch
          %194 = sbr.rel (%p192) target = $region16
        $region15: #{feed_forward.1} parent=11 // pred_region
          %p195 = scmp.lt.s32.totalorder %s24, 0
          %s196 = scalar_select %p195, %s24, 0
          %s197 = smul.addr %s196, 8
          %s198 = scalar_lea.vmem %s1, %s197
        $region16: #{feed_forward.1} parent=11 // pred_fallthru
          _
        // Predicated region
        $region17: #{feed_forward.1} parent=11 // pred_check
          %p199 = pneg %p104
        $region18: #{feed_forward.1} parent=11 // pred_check_branch
          %201 = sbr.rel (%p199) target = $region20
        $region19: #{feed_forward.1} parent=11 // pred_region
          %p202 = scmp.lt.s32.totalorder %s24, 0
          %s203 = scalar_select %p202, %s24, 0
          %s204 = scalar_lea.vmem %s2, %s203
        $region20: #{feed_forward.1} parent=11 // pred_fallthru
          _
        // Predicated region
        $region21: #{feed_forward.1} parent=11 // pred_check
          %p205 = pneg %p130
        $region22: #{feed_forward.1} parent=11 // pred_check_branch
          %207 = sbr.rel (%p205) target = $region24
        $region23: #{feed_forward.1} parent=11 // pred_region
          %s208 = smul.u32 16, %s24
          %p209 = scmp.lt.s32.totalorder %s208, 15
          %s210 = scalar_select %p209, %s208, 15
          %s211 = smul.addr %s210, 8
          %s212 = scalar_lea.vmem %s3, %s211
          %s213 = smul.u32 16, %s24
        $region24: #{feed_forward.1} parent=11 // pred_fallthru
          _
        // Predicated region
        $region25: #{feed_forward.1} parent=11 // pred_check
          %p214 = pneg %p151
        $region26: #{feed_forward.1} parent=11 // pred_check_branch
          %216 = sbr.rel (%p214) target = $region28
        $region27: #{feed_forward.1} parent=11 // pred_region
          _
        $region28: #{feed_forward.1} parent=11 // pred_fallthru
          _
      $region12: #{feed_forward.1} parent=5 // pred_fallthru
        _
      %p217 = scmp.lt.s32.totalorder %s14, 2
      // Predicated region
      $region29: #{feed_forward.1} parent=5 // pred_check
        %p218 = pneg %p217
      $region30: #{feed_forward.1} parent=5 // pred_check_branch
        %220 = sbr.rel (%p218) target = $region32
      $region31: #{feed_forward.1} parent=5 // pred_region
        // Predicated region
        $region33: #{feed_forward.1} parent=31 // pred_check
          %p221 = pneg %p46
        $region34: #{feed_forward.1} parent=31 // pred_check_branch
          %223 = sbr.rel (%p221) target = $region36
        $region35: #{feed_forward.1} parent=31 // pred_region
          %p224 = scmp.lt.s32.totalorder %s21, 1
          %s225 = scalar_select %p224, %s21, 1
          %s226 = smul.addr %s225, 8
          %s227 = scalar_lea.vmem %s0, %s226
        $region36: #{feed_forward.1} parent=31 // pred_fallthru
          _
      $region32: #{feed_forward.1} parent=5 // pred_fallthru
        _
      %p228 = scmp.le.s32.totalorder 1, %s14
      %p229 = scmp.lt.s32.totalorder %s14, 3
      %p230 = pnand %p228, %p229
      %p231 = pneg %p230
      // Predicated region
      $region37: #{feed_forward.1} parent=5 // pred_check
        _
      $region38: #{feed_forward.1} parent=5 // pred_check_branch
        %233 = sbr.rel (%p230) target = $region40
      $region39: #{feed_forward.1} parent=5 // pred_region
        %s234 = ssub.s32 %s14, 1
        %p235 = scmp.lt.s32.totalorder %s23, 1
        %s236 = scalar_select %p235, %s23, 1
        %s237 = smul.addr %s236, 8
        %s238 = scalar_lea.vmem %s0, %s237
        %p239 = pneg %p52
        %p240 = pneg %p49
        %p241 = scmp.lt.s32.totalorder %s24, 0
        %s242 = scalar_select %p241, %s24, 0
        %s243 = smul.addr %s242, 8
        %s244 = scalar_lea.vmem %s1, %s243
        %p245 = pneg %p78
        %p246 = pneg %p75
        %p247 = scmp.lt.s32.totalorder %s24, 0
        %s248 = scalar_select %p247, %s24, 0
        %s249 = scalar_lea.vmem %s2, %s248
        %p250 = pneg %p104
        %p251 = pneg %p101
        %s252 = smul.u32 16, %s24
        %p253 = scmp.lt.s32.totalorder %s252, 15
        %s254 = scalar_select %p253, %s252, 15
        %s255 = smul.addr %s254, 8
        %s256 = scalar_lea.vmem %s3, %s255
        %p257 = pneg %p130
        %p258 = pneg %p127
        %p259 = pneg %p151
        %p260 = pneg %p148
        %p261 = pneg %p177
        %p262 = pneg %p174
        %s263 = sand.u32 %s164, 1
        %s264 = scalar_lea.sflag [#allocation4], %s263
        %s265 = sand.u32 %s164, 1
        %s266 = smul.addr %s265, 8
        %s267 = scalar_lea.vmem [#allocation3], %s266
        %p268 = scmp.lt.s32.totalorder %s23, 1
        %s269 = scalar_select %p268, %s23, 1
        %s270 = smul.addr %s269, 8
        %s271 = scalar_lea.vmem %s0, %s270
        %p272 = scmp.lt.s32.totalorder %s24, 0
        %s273 = scalar_select %p272, %s24, 0
        %s274 = smul.addr %s273, 8
        %s275 = scalar_lea.vmem %s1, %s274
        %p276 = scmp.lt.s32.totalorder %s24, 0
        %s277 = scalar_select %p276, %s24, 0
        %s278 = scalar_lea.vmem %s2, %s277
        %s279 = smul.u32 16, %s24
        %p280 = scmp.lt.s32.totalorder %s279, 15
        %s281 = scalar_select %p280, %s279, 15
        %s282 = smul.addr %s281, 8
        %s283 = scalar_lea.vmem %s3, %s282
        %s284 = smul.u32 16, %s24
        %p285 = scmp.eq.s32.totalorder %s24, 0
        // Predicated region
        $region41: #{feed_forward.1} parent=39 // pred_check
          %p286 = pneg %p285
        $region42: #{feed_forward.1} parent=39 // pred_check_branch
          %288 = sbr.rel (%p286) target = $region44
        $region43: #{feed_forward.1} parent=39 // pred_region
          %vm289 = vcmask 261120
          %290 = vst.msk [vmem:[#allocation2] sm:$0xff] %vm289, 0.0
        $region44: #{feed_forward.1} parent=39 // pred_fallthru
          _
        %v291 = vld [vmem:[%s271] sm:$0xff]
        %v292 = vld [vmem:[%s275] sm:$0xff]
        %v293 = vld [vmem:[%s275 + $0x8] sm:$0xff]
        %v294 = vld [vmem:[%s275 + $0x10] sm:$0xff]
        %v295 = vld [vmem:[%s275 + $0x18] sm:$0xff]
        %v296 = vld [vmem:[%s278] sm:$0x1]
        %v298 = vlaneseq
        %v299 = vshrl.u32 %v298, 7
        %v300 = vsub.s32 0, %v299
        %v301 = vrot.slane %v296, %v300
        %vm303 = vcmask 261120
        %v305 = vsel %vm303, %v291, 0
        %307 = vmatprep.subr.mxu0 0.0
        %308 = vmatpush1.msra.mxu0 %v292
        %309 = vmatprep.subr.mxu0 0.0
        %310 = vmatpush1.msra.mxu0 %v293
        %311 = vmatprep.subr.mxu0 0.0
        %312 = vmatpush1.msra.mxu0 %v294
        %313 = vmatprep.subr.mxu0 0.0
        %314 = vmatpush1.msra.mxu0 %v295
        %315 = vmatprep.subr.mxu0 0.0
        %316 = vmatpush1.msra.mxu0 0.0
        %317 = vmatprep.subr.mxu0 0.0
        %318 = vmatpush1.msra.mxu0 0.0
        %319 = vmatprep.subr.mxu0 0.0
        %320 = vmatpush1.msra.mxu0 0.0
        %321 = vmatprep.subr.mxu0 0.0
        %322 = vmatpush1.msra.mxu0 0.0
        %323 = vmatprep.subr.mxu0 0.0
        %324 = vmatpush1.msra.mxu0 0.0
        %325 = vmatprep.subr.mxu0 0.0
        %326 = vmatpush1.msra.mxu0 0.0
        %327 = vmatprep.subr.mxu0 0.0
        %328 = vmatpush1.msra.mxu0 0.0
        %329 = vmatprep.subr.mxu0 0.0
        %330 = vmatpush1.msra.mxu0 0.0
        %331 = vmatprep.subr.mxu0 0.0
        %332 = vmatpush1.msra.mxu0 0.0
        %333 = vmatprep.subr.mxu0 0.0
        %334 = vmatpush1.msra.mxu0 0.0
        %335 = vmatprep.subr.mxu0 0.0
        %336 = vmatpush1.msra.mxu0 0.0
        %337 = vmatprep.subr.mxu0 0.0
        %338 = vmatpush1.msra.mxu0 0.0
        %339 = vmatprep.subr.mxu0 0.0
        %340 = vmatpush1.msra.mxu0 0.0
        %341 = vmatprep.subr.mxu0 0.0
        %342 = vmatpush1.msra.mxu0 0.0
        %343 = vmatprep.subr.mxu0 0.0
        %344 = vmatpush1.msra.mxu0 0.0
        %345 = vmatprep.subr.mxu0 0.0
        %346 = vmatpush1.msra.mxu0 0.0
        %347 = vmatprep.subr.mxu0 0.0
        %348 = vmatpush1.msra.mxu0 0.0
        %349 = vmatprep.subr.mxu0 0.0
        %350 = vmatpush1.msra.mxu0 0.0
        %351 = vmatprep.subr.mxu0 0.0
        %352 = vmatpush1.msra.mxu0 0.0
        %353 = vmatprep.subr.mxu0 0.0
        %354 = vmatpush1.msra.mxu0 0.0
        %355 = vmatprep.subr.mxu0 0.0
        %356 = vmatpush1.msra.mxu0 0.0
        %357 = vmatprep.subr.mxu0 0.0
        %358 = vmatpush1.msra.mxu0 0.0
        %359 = vmatprep.subr.mxu0 0.0
        %360 = vmatpush1.msra.mxu0 0.0
        %361 = vmatprep.subr.mxu0 0.0
        %362 = vmatpush1.msra.mxu0 0.0
        %363 = vmatprep.subr.mxu0 0.0
        %364 = vmatpush1.msra.mxu0 0.0
        %365 = vmatprep.subr.mxu0 0.0
        %366 = vmatpush1.msra.mxu0 0.0
        %367 = vmatprep.subr.mxu0 0.0
        %368 = vmatpush1.msra.mxu0 0.0
        %369 = vmatprep.subr.mxu0 0.0
        %370 = vmatpush1.msra.mxu0 0.0
        %371 = vmatprep.mubr.f32.mxu0 0.0
        %372 = vmatmul.mubr.f32.gmra.mrb[0].mxu0 %v305
        %v373 = vpop.f32.mrb[0].mxu0
        %v374 = vadd.f32 %v301, %v373
        %v375 = vpop.f32.mrb[0].mxu0
        %376 = vdwg.mxu0
        %v377 = vmax.f32 %v374, 0.0
        %v378 = vld [vmem:[#allocation2] sm:$0xff]
        %v379 = vld [vmem:[%s283] sm:$0xff]
        %v380 = vld [vmem:[%s283 + $0x8] sm:$0xff]
        %v381 = vld [vmem:[%s283 + $0x10] sm:$0xff]
        %v382 = vld [vmem:[%s283 + $0x18] sm:$0xff]
        %v383 = vld [vmem:[%s283 + $0x20] sm:$0xff]
        %v384 = vld [vmem:[%s283 + $0x28] sm:$0xff]
        %v385 = vld [vmem:[%s283 + $0x30] sm:$0xff]
        %v386 = vld [vmem:[%s283 + $0x38] sm:$0xff]
        %v387 = vld [vmem:[%s283 + $0x40] sm:$0xff]
        %v388 = vld [vmem:[%s283 + $0x48] sm:$0xff]
        %v389 = vld [vmem:[%s283 + $0x50] sm:$0xff]
        %v390 = vld [vmem:[%s283 + $0x58] sm:$0xff]
        %v391 = vld [vmem:[%s283 + $0x60] sm:$0xff]
        %v392 = vld [vmem:[%s283 + $0x68] sm:$0xff]
        %v393 = vld [vmem:[%s283 + $0x70] sm:$0xff]
        %v394 = vld [vmem:[%s283 + $0x78] sm:$0xff]
        %395 = vmatprep.subr.mxu0 0.0
        %396 = vmatpush1.msra.mxu0 %v379
        %397 = vmatprep.subr.mxu0 0.0
        %398 = vmatpush1.msra.mxu0 %v380
        %399 = vmatprep.subr.mxu0 0.0
        %400 = vmatpush1.msra.mxu0 %v381
        %401 = vmatprep.subr.mxu0 0.0
        %402 = vmatpush1.msra.mxu0 %v382
        %403 = vmatprep.subr.mxu0 0.0
        %404 = vmatpush1.msra.mxu0 %v383
        %405 = vmatprep.subr.mxu0 0.0
        %406 = vmatpush1.msra.mxu0 %v384
        %407 = vmatprep.subr.mxu0 0.0
        %408 = vmatpush1.msra.mxu0 %v385
        %409 = vmatprep.subr.mxu0 0.0
        %410 = vmatpush1.msra.mxu0 %v386
        %411 = vmatprep.subr.mxu0 0.0
        %412 = vmatpush1.msra.mxu0 %v387
        %413 = vmatprep.subr.mxu0 0.0
        %414 = vmatpush1.msra.mxu0 %v388
        %415 = vmatprep.subr.mxu0 0.0
        %416 = vmatpush1.msra.mxu0 %v389
        %417 = vmatprep.subr.mxu0 0.0
        %418 = vmatpush1.msra.mxu0 %v390
        %419 = vmatprep.subr.mxu0 0.0
        %420 = vmatpush1.msra.mxu0 %v391
        %421 = vmatprep.subr.mxu0 0.0
        %422 = vmatpush1.msra.mxu0 %v392
        %423 = vmatprep.subr.mxu0 0.0
        %424 = vmatpush1.msra.mxu0 %v393
        %425 = vmatprep.subr.mxu0 0.0
        %426 = vmatpush1.msra.mxu0 %v394
        %427 = vmatprep.subr.mxu0 0.0
        %428 = vmatpush1.msra.mxu0 0.0
        %429 = vmatprep.subr.mxu0 0.0
        %430 = vmatpush1.msra.mxu0 0.0
        %431 = vmatprep.subr.mxu0 0.0
        %432 = vmatpush1.msra.mxu0 0.0
        %433 = vmatprep.subr.mxu0 0.0
        %434 = vmatpush1.msra.mxu0 0.0
        %435 = vmatprep.subr.mxu0 0.0
        %436 = vmatpush1.msra.mxu0 0.0
        %437 = vmatprep.subr.mxu0 0.0
        %438 = vmatpush1.msra.mxu0 0.0
        %439 = vmatprep.subr.mxu0 0.0
        %440 = vmatpush1.msra.mxu0 0.0
        %441 = vmatprep.subr.mxu0 0.0
        %442 = vmatpush1.msra.mxu0 0.0
        %443 = vmatprep.subr.mxu0 0.0
        %444 = vmatpush1.msra.mxu0 0.0
        %445 = vmatprep.subr.mxu0 0.0
        %446 = vmatpush1.msra.mxu0 0.0
        %447 = vmatprep.subr.mxu0 0.0
        %448 = vmatpush1.msra.mxu0 0.0
        %449 = vmatprep.subr.mxu0 0.0
        %450 = vmatpush1.msra.mxu0 0.0
        %451 = vmatprep.subr.mxu0 0.0
        %452 = vmatpush1.msra.mxu0 0.0
        %453 = vmatprep.subr.mxu0 0.0
        %454 = vmatpush1.msra.mxu0 0.0
        %455 = vmatprep.subr.mxu0 0.0
        %456 = vmatpush1.msra.mxu0 0.0
        %457 = vmatprep.subr.mxu0 0.0
        %458 = vmatpush1.msra.mxu0 0.0
        %459 = vmatprep.mubr.f32.mxu0 0.0
        %460 = vmatmul.mubr.f32.gmra.mrb[0].mxu0 %v377
        %v461 = vpop.f32.mrb[0].mxu0
        %v462 = vadd.f32 0.0, %v461
        %v463 = vpop.f32.mrb[0].mxu0
        %464 = vdwg.mxu0
        %v465 = vadd.f32 %v378, %v462
        %466 = vst.msk [vmem:[#allocation2] sm:$0xff] %vm303, %v465
        // Predicated region
        $region45: #{feed_forward.1} parent=39 // pred_check
          %p467 = pneg %p285
        $region46: #{feed_forward.1} parent=39 // pred_check_branch
          %469 = sbr.rel (%p467) target = $region48
        $region47: #{feed_forward.1} parent=39 // pred_region
          %v470 = vld [vmem:[#allocation2] sm:$0xff]
          %v471 = vld [vmem:[%s4] sm:$0x1]
          %v473 = vlaneseq
          %v474 = vshrl.u32 %v473, 7
          %v475 = vsub.s32 0, %v474
          %v476 = vrot.slane %v471, %v475
          %v478 = vadd.f32 %v470, %v476
          %479 = vst.msk [vmem:[%s267] sm:$0xff] %vm303, %v478
        $region48: #{feed_forward.1} parent=39 // pred_fallthru
          _
        %s480 = sand.u32 %s164, 1
        %s481 = scalar_lea.sflag [#allocation4], %s480
        %s482 = sand.u32 %s164, 1
        %s483 = smul.addr %s482, 8
        %s484 = scalar_lea.vmem [#allocation3], %s483
        // Predicated region
        $region49: #{feed_forward.1} parent=39 // pred_check
          %p485 = pneg %p174
        $region50: #{feed_forward.1} parent=39 // pred_check_branch
          %487 = sbr.rel (%p485) target = $region52
        $region51: #{feed_forward.1} parent=39 // pred_region
          %s489 = ssub.s32 128, 128
          %490 = vsyncadd %s481, %s489
          %s491 = smul.addr %s23, 128
          %s492 = scalar_lea.hbm %s5, %s491
          %s494 = sshll.u32 %s484, 4
          %s495 = int_to_ptr.vmem [resolvable:$true] %s494
          %497 = dma.vmem_to_hbm [thread:$0]  %s495, 128, %s492, %s481
        $region52: #{feed_forward.1} parent=39 // pred_fallthru
          _
      $region40: #{feed_forward.1} parent=5 // pred_fallthru
        _
      %p498 = scmp.le.s32.totalorder 2, %s14
      // Predicated region
      $region53: #{feed_forward.1} parent=5 // pred_check
        %p499 = pneg %p498
      $region54: #{feed_forward.1} parent=5 // pred_check_branch
        %501 = sbr.rel (%p499) target = $region56
      $region55: #{feed_forward.1} parent=5 // pred_region
        %s502 = ssub.s32 %s14, 2
        // Predicated region
        $region57: #{feed_forward.1} parent=55 // pred_check
          %p503 = pneg %p180
        $region58: #{feed_forward.1} parent=55 // pred_check_branch
          %505 = sbr.rel (%p503) target = $region60
        $region59: #{feed_forward.1} parent=55 // pred_region
          %s506 = sand.u32 %s165, 1
          %s507 = scalar_lea.sflag [#allocation4], %s506
          %s508 = sand.u32 %s165, 1
          %s509 = smul.addr %s508, 8
          %s510 = scalar_lea.vmem [#allocation3], %s509
          %511 = dma.done %s507, 128
        $region60: #{feed_forward.1} parent=55 // pred_fallthru
          _
      $region56: #{feed_forward.1} parent=5 // pred_fallthru
        _
    $region6: #{feed_forward.1} parent=1 // loop_footer
      %s18 = sadd.s32 1, %s14
    $region7: #{feed_forward.1} parent=1 // loop_footer_branch
      %13 = sbr.rel target = $region3
    $region8: #{feed_forward.1} parent=1 // loop_exit
      _
    %512 = vsyncpa [#allocation4], 1
    %s513 = scalar_lea.sflag [#allocation4], 1
    %514 = vsyncpa %s513, 1

</llo_original>
